<compile_context>
chip_gen: v5e
topology: v5e:2x2
jax: 0.10.0
libtpu: 0.0.40
codegen_flags: <defaults>
</compile_context>

<pallas_src>
import functools

import jax
import jax.numpy as jnp
import numpy as np
from jax.experimental import pallas as pl
from jax.experimental.pallas import tpu as pltpu


# ----------------------------------------------------------------------------
# Parameter / buffer setup (matches PositionalEncoding.__init__)
# ----------------------------------------------------------------------------
def make_positional_encoding(d_model: int, max_len: int = 5000) -> jnp.ndarray:
    """Build the sinusoidal pe buffer exactly like the PyTorch module."""
    position = np.arange(0, max_len, dtype=np.float32)[:, None]          # (L, 1)
    div_term = np.exp(
        np.arange(0, d_model, 2, dtype=np.float32) * (-np.log(10000.0) / d_model)
    )                                                                     # (D/2,)
    pe = np.zeros((max_len, d_model), dtype=np.float32)
    pe[:, 0::2] = np.sin(position * div_term)
    pe[:, 1::2] = np.cos(position * div_term)
    return jnp.asarray(pe[None, :, :])                                    # (1, L, D)


# ----------------------------------------------------------------------------
# Pallas kernel: out = dropout(x + scale * pe)
# ----------------------------------------------------------------------------
def _pe_kernel(scale_ref, seed_ref, x_ref, pe_ref, o_ref, *, p: float, training: bool):
    # scale_ref / seed_ref are (1,) scalars in SMEM.
    # x_ref/o_ref blocks are (1, tR, LANE); pe_ref block is (tR, LANE), shared
    # across the batch (inner grid axis) so its DMA is skipped between steps.
    scale = scale_ref[0]
    y = x_ref[...] + scale * pe_ref[...]

    if training and p > 0.0:
        # Inverted dropout using the TPU hardware PRNG.  Re-seed per
        # (row_tile, batch) grid point so tiles get independent streams.
        # Integer-threshold compare avoids the shift / u32->f32 convert / mul.
        # TODO(synk): torch.nn.Dropout's exact RNG stream cannot be reproduced;
        # this path needs a real TPU (hardware PRNG is unavailable in interpret
        # mode), so the demo below only exercises eval mode.
        pltpu.prng_seed(seed_ref[0], pl.program_id(0), pl.program_id(1))
        bits = pltpu.bitcast(pltpu.prng_random_bits(y.shape), jnp.uint32)
        threshold = jnp.uint32(int(p * (2.0 ** 32)))
        keep = bits >= threshold                      # P(keep) = 1 - p
        y = jnp.where(keep, y * (1.0 / (1.0 - p)), jnp.zeros_like(y))

    o_ref[...] = y.astype(o_ref.dtype)


# ----------------------------------------------------------------------------
# Wrapper: lane-dense view + row tiling + pallas_call
# ----------------------------------------------------------------------------
def positional_encoding_forward(
    x: jnp.ndarray,        # (B, S, D)
    pe: jnp.ndarray,       # (1, max_len, D)
    scale: jnp.ndarray,    # (1,)  (the nn.Parameter torch.ones(1))
    *,
    dropout_p: float = 0.1,
    training: bool = False,
    seed: int = 0,
) -> jnp.ndarray:
    B, S, D = x.shape
    max_len = pe.shape[1]
    assert S <= max_len, "sequence length exceeds positional-encoding buffer"
    itemsize = jnp.dtype(x.dtype).itemsize

    # ---- lane-dense row view ------------------------------------------------
    if (S * D) % 128 == 0 and (max_len * D) % 128 == 0:
        # Free contiguous reshapes; last dim becomes exactly 128 lanes.
        lane = 128
        R = (S * D) // 128
        x_v = x.reshape(B, R, lane)
        pe_v = pe.reshape((max_len * D) // 128, lane)
    else:
        # Fallback layout (still correct; stores may be lane-masked if D < 128).
        lane = D
        R = S
        x_v = x
        pe_v = pe.reshape(max_len, D)

    # ---- row-tile size: ~2 MiB per tile, multiple of 8 sublanes --------------
    TARGET_TILE_BYTES = 2 * 1024 * 1024
    target_rows = max(8, (TARGET_TILE_BYTES // (lane * itemsize)) // 8 * 8)
    if R >= 8:
        t_r = min(target_rows, (R // 8) * 8)
        num_r = pl.cdiv(R, t_r)                 # ragged last tile handled by Pallas
    else:
        # Toy-sized input: single (R, lane) tile.  Static tiny slice of pe so the
        # pe block equals its full dims (keeps block-shape rules satisfied).
        t_r = R
        num_r = 1
        pe_v = jax.lax.slice(pe_v, (0, 0), (R, lane))

    seed_arr = jnp.asarray([seed], dtype=jnp.int32)
    kernel = functools.partial(_pe_kernel, p=float(dropout_p), training=bool(training))

    out = pl.pallas_call(
        kernel,
        out_shape=jax.ShapeDtypeStruct((B, R, lane), x.dtype),
        grid_spec=pltpu.PrefetchScalarGridSpec(
            num_scalar_prefetch=0,
            # Batch iterates innermost -> pe block index constant across it,
            # so its DMA is elided between consecutive steps.
            grid=(num_r, B),
            in_specs=[
                pl.BlockSpec(memory_space=pltpu.MemorySpace.SMEM),        # scale (1,)
                pl.BlockSpec(memory_space=pltpu.MemorySpace.SMEM),        # seed  (1,)
                pl.BlockSpec((1, t_r, lane), lambda r, b: (b, r, 0)),     # x tile
                pl.BlockSpec((t_r, lane),    lambda r, b: (r, 0)),        # pe tile (shared)
            ],
            out_specs=pl.BlockSpec((1, t_r, lane), lambda r, b: (b, r, 0)),
        ),
        compiler_params=pltpu.CompilerParams(
            dimension_semantics=("parallel", "parallel"),   # v7x: shard both axes over TCs
            vmem_limit_bytes=32 * 1024 * 1024,
        ),
    )(scale, seed_arr, x_v, pe_v)

    return out.reshape(B, S, D)


# ----------------------------------------------------------------------------
# Main
# ----------------------------------------------------------------------------
if __name__ == "__main__":
    B, S, D = 2, 8, 32          # small shapes: batch=2, seq=8, d_model=32
    max_len = 64

    key = jax.random.PRNGKey(0)
    x = jax.random.normal(key, (B, S, D), dtype=jnp.float32)

    pe = make_positional_encoding(D, max_len)                   # (1, 64, 32)
    scale = jnp.ones((1,), dtype=jnp.float32)                   # nn.Parameter(torch.ones(1))

    # Eval-mode forward (dropout is identity) -- deterministic, checked against ref.
    out = positional_encoding_forward(x, pe, scale, dropout_p=0.1, training=False)
    out = jax.block_until_ready(out)

    ref = x + scale[0] * pe[:, :S, :]
    np.testing.assert_allclose(np.asarray(out), np.asarray(ref), rtol=1e-6, atol=1e-6)

    # TODO(synk): training-mode dropout (in-kernel TPU hardware PRNG) is implemented
    # in _pe_kernel but not exercised here, since the hardware PRNG primitives are
    # unavailable outside a real TPU lowering (e.g. interpret mode).

    print("KERNEL_OK")
</pallas_src>

<mosaic_0001>
module attributes {stable_mosaic.version = 11 : i64} {
  func.func @_pe_kernel(%arg0: i32, %arg1: i32, %arg2: memref<1xf32, #tpu.memory_space<smem>>, %arg3: memref<1xi32, #tpu.memory_space<smem>>, %arg4: memref<1x2x128xf32, #tpu.memory_space<vmem>>, %arg5: memref<2x128xf32, #tpu.memory_space<vmem>>, %arg6: memref<1x2x128xf32, #tpu.memory_space<vmem>>) attributes {dimension_semantics = [#tpu.dimension_semantics<parallel>, #tpu.dimension_semantics<parallel>], iteration_bounds = array<i64: 1, 2>, scalar_prefetch = 0 : i64, scratch_operands = 0 : i64, tpu.core_type = #tpu.core_type<tc>, window_params = [{transform_indices = @transform_0, window_bounds = array<i64: 1>}, {transform_indices = @transform_1, window_bounds = array<i64: 1>}, {transform_indices = @transform_2, window_bounds = array<i64: 1, 2, 128>}, {transform_indices = @transform_3, window_bounds = array<i64: 2, 128>}, {transform_indices = @transform_4, window_bounds = array<i64: 1, 2, 128>}]} {
    %c0 = arith.constant 0 : index
    %0 = memref.load %arg2[%c0] : memref<1xf32, #tpu.memory_space<smem>>
    %c0_0 = arith.constant 0 : index
    %c0_1 = arith.constant 0 : index
    %c0_2 = arith.constant 0 : index
    %1 = vector.load %arg4[%c0_0, %c0_1, %c0_2] : memref<1x2x128xf32, #tpu.memory_space<vmem>>, vector<1x2x128xf32>
    %c0_3 = arith.constant 0 : index
    %c0_4 = arith.constant 0 : index
    %2 = vector.load %arg5[%c0_3, %c0_4] : memref<2x128xf32, #tpu.memory_space<vmem>>, vector<2x128xf32>
    %3 = vector.broadcast %0 : f32 to vector<2x128xf32>
    %4 = arith.mulf %3, %2 : vector<2x128xf32>
    %5 = vector.shape_cast %4 : vector<2x128xf32> to vector<1x2x128xf32>
    %6 = arith.addf %1, %5 : vector<1x2x128xf32>
    %c0_5 = arith.constant 0 : index
    %c0_6 = arith.constant 0 : index
    %c0_7 = arith.constant 0 : index
    %7 = vector.load %arg6[%c0_5, %c0_6, %c0_7] : memref<1x2x128xf32, #tpu.memory_space<vmem>>, vector<1x2x128xf32>
    tpu.vector_store %arg6[%c0_5, %c0_6, %c0_7], %6 {strides = array<i32>} : memref<1x2x128xf32, #tpu.memory_space<vmem>>, vector<1x2x128xf32>,
    return
  }
  func.func @transform_0(%arg0: i32, %arg1: i32) -> i32 {
    %c0_i32 = arith.constant 0 : i32
    %c0_i32_0 = arith.constant 0 : i32
    return %c0_i32 : i32
  }
  func.func @transform_1(%arg0: i32, %arg1: i32) -> i32 {
    %c0_i32 = arith.constant 0 : i32
    %c0_i32_0 = arith.constant 0 : i32
    return %c0_i32 : i32
  }
  func.func @transform_2(%arg0: i32, %arg1: i32) -> (i32, i32, i32) {
    %c0_i32 = arith.constant 0 : i32
    %c0_i32_0 = arith.constant 0 : i32
    return %arg1, %arg0, %c0_i32 : i32, i32, i32
  }
  func.func @transform_3(%arg0: i32, %arg1: i32) -> (i32, i32) {
    %c0_i32 = arith.constant 0 : i32
    %c0_i32_0 = arith.constant 0 : i32
    return %arg0, %c0_i32 : i32, i32
  }
  func.func @transform_4(%arg0: i32, %arg1: i32) -> (i32, i32, i32) {
    %c0_i32 = arith.constant 0 : i32
    %c0_i32_0 = arith.constant 0 : i32
    return %arg1, %arg0, %c0_i32 : i32, i32, i32
  }
}

</mosaic_0001>

<llo_original>
// kernel: tpu_custom_call.1
$region0: #{tpu_custom_call.1}
  #allocation0 [shape = 'u32[]', space=smem, size = 0x4, offset = 0x4, fixed_abs, tag = 'smem constant byte address 0x4 - core index']
  #allocation1 [shape = 'u32[72,128]{1,0:T(1,128)}', space=vmem, size = 0x9000, scoped, tag = 'internal scratch']
  #allocation2 [shape = 'f32[1]{0:T(128)S(6)}', space=smem, size = 0x200, scoped, tag = 'scoped memory for tpu_custom_call.1']
  #allocation3 [shape = 's32[1]{0:T(128)S(6)}', space=smem, size = 0x200, scoped, tag = 'scoped memory for tpu_custom_call.1']
  %s0 = inlined_call_operand.<no memory space> [shape: f32[1], index: 0, kind: input, shape index: {}]
  %s1 = inlined_call_operand.<no memory space> [shape: s32[1], index: 1, kind: input, shape index: {}]
  %s2 = inlined_call_operand.vmem [shape: f32[2,2,128], index: 2, kind: input, shape index: {}]
  %s3 = inlined_call_operand.hbm [shape: f32[2,128], index: 3, kind: input, shape index: {}]
  %s4 = inlined_call_operand.hbm [shape: f32[2,2,128], index: 4, kind: output, shape index: {}]
  %s5 = sld [smem:[#allocation0]]
  $region53: #{tpu_custom_call.1} parent=0
    _
  %s7 = ssub.s32 1, %s5
  %s8 = scalar_select 0, %s7, %s5
  %9 = sst [smem:[#allocation2]] %s0
  %10 = sst [smem:[#allocation3]] %s1
  $region1: #{tpu_custom_call.1} parent=0
    #allocation4 [shape = 'u8[1024]{0}', space=vmem, size = 0x400, scoped, tag = 'input window, operand 3, single buffered']
    #allocation5 [shape = 's32[2]{0}', space=sflag, size = 0x8, scoped, tag = 'scoped memory for tpu_custom_call.1']
    #allocation6 [shape = 's32[2]{0}', space=sflag, size = 0x8, scoped, tag = 'scoped memory for tpu_custom_call.1']
    #allocation7 [shape = 'u8[2048]{0}', space=vmem, size = 0x800, scoped, tag = 'output window, operand 0']
    %11 = vsyncpa [#allocation5], 0
    %12 = vsyncpa [#allocation6], 0
    %s13 = scalar_lea.sflag [#allocation6], 1
    %14 = vsyncpa %s13, 0
    loop: start=0, step=1, limit=4
    $region2: #{tpu_custom_call.1} parent=1 // loop_pre_header
      _
    $region3: #{tpu_custom_call.1} parent=1 // loop_header
      %s16 = sphi 0, %s20
      %p17 = scmp.ge.s32.totalorder %s16, 4
      %s23 = sphi 0, %s35
      %s24 = sphi 0, %s31
      %s25 = sphi 0, %s23
      %s26 = sphi 0, %s24
      %s27 = sphi 0, %s25
      %s28 = sphi 0, %s26
      %s36 = sphi 0, %s36
      %s38 = sphi 0, %s36
      %s39 = sphi 0, %s38
      %s53 = sphi 0, %s39
      %s57 = sphi 0, %s57
      %s59 = sphi 0, %s57
      %s60 = sphi 0, %s59
      %s74 = sphi 0, %s60
      %s82 = sphi 0, %s84
      %s85 = sphi 0, %s82
      %s86 = sphi 0, %s85
      %s102 = sphi 0, %s86
      %s108 = sphi 0, %s110
      %s111 = sphi 0, %s108
      %s112 = sphi 0, %s111
      %s128 = sphi 0, %s112
      %s136 = sphi 0, %s138
      %s139 = sphi 0, %s136
      %s140 = sphi 0, %s139
      %s156 = sphi 0, %s140
    $region4: #{tpu_custom_call.1} parent=1 // loop_header_branch
      %19 = sbr.rel (%p17) target = $region8
    $region5: #{tpu_custom_call.1} parent=1 // loop_body
      %s21 = ssub.s32 %s16, 1
      %s22 = ssub.s32 %s16, 2
      %s29 = sadd.s32 1, %s24
      %p30 = scmp.ge.s32.totalorder %s29, 2
      %s31 = scalar_select %p30, 0, %s29
      %s32 = sadd.s32 1, %s23
      %s33 = scalar_select %p30, %s32, %s23
      %p34 = scmp.ge.s32.totalorder %s33, 1
      %s35 = scalar_select %p34, 0, %s33
      %s37 = sadd.s32 %s36, 1
      %p40 = scmp.eq.s32.totalorder %s16, 1
      %p41 = scmp.ne.s32.totalorder %s36, %s38
      %p42 = scmp.eq.s32.totalorder %s16, 0
      %p43 = por %p41, %p42
      %p44 = scmp.ne.s32.totalorder %s36, %s38
      %p45 = scmp.eq.s32.totalorder %s21, 1
      %p46 = por %p44, %p45
      %p47 = scmp.ne.s32.totalorder %s38, %s39
      %p48 = scmp.eq.s32.totalorder %s21, 0
      %p49 = por %p47, %p48
      %p50 = scmp.ne.s32.totalorder %s38, %s39
      %p51 = scmp.eq.s32.totalorder %s22, 1
      %p52 = por %p50, %p51
      %p54 = scmp.ne.s32.totalorder %s39, %s53
      %p55 = scmp.eq.s32.totalorder %s22, 0
      %p56 = por %p54, %p55
      %s58 = sadd.s32 %s57, 1
      %p61 = scmp.eq.s32.totalorder %s16, 1
      %p62 = scmp.ne.s32.totalorder %s57, %s59
      %p63 = scmp.eq.s32.totalorder %s16, 0
      %p64 = por %p62, %p63
      %p65 = scmp.ne.s32.totalorder %s57, %s59
      %p66 = scmp.eq.s32.totalorder %s21, 1
      %p67 = por %p65, %p66
      %p68 = scmp.ne.s32.totalorder %s59, %s60
      %p69 = scmp.eq.s32.totalorder %s21, 0
      %p70 = por %p68, %p69
      %p71 = scmp.ne.s32.totalorder %s59, %s60
      %p72 = scmp.eq.s32.totalorder %s22, 1
      %p73 = por %p71, %p72
      %p75 = scmp.ne.s32.totalorder %s60, %s74
      %p76 = scmp.eq.s32.totalorder %s22, 0
      %p77 = por %p75, %p76
      %s78 = ssub.s32 %s24, %s31
      %s79 = ssub.s32 %s23, %s35
      %s80 = sor.u32 %s78, %s79
      %p81 = scmp.eq.s32.totalorder %s80, 0
      %s83 = sadd.s32 %s82, 1
      %s84 = scalar_select %p81, %s82, %s83
      %p87 = pneg %p81
      %p88 = scmp.eq.s32.totalorder %s16, 1
      %p89 = por %p87, %p88
      %p90 = scmp.ne.s32.totalorder %s82, %s85
      %p91 = scmp.eq.s32.totalorder %s16, 0
      %p92 = por %p90, %p91
      %p93 = scmp.ne.s32.totalorder %s82, %s85
      %p94 = scmp.eq.s32.totalorder %s21, 1
      %p95 = por %p93, %p94
      %p96 = scmp.ne.s32.totalorder %s85, %s86
      %p97 = scmp.eq.s32.totalorder %s21, 0
      %p98 = por %p96, %p97
      %p99 = scmp.ne.s32.totalorder %s85, %s86
      %p100 = scmp.eq.s32.totalorder %s22, 1
      %p101 = por %p99, %p100
      %p103 = scmp.ne.s32.totalorder %s86, %s102
      %p104 = scmp.eq.s32.totalorder %s22, 0
      %p105 = por %p103, %p104
      %s106 = ssub.s32 %s23, %s35
      %p107 = scmp.eq.s32.totalorder %s106, 0
      %s109 = sadd.s32 %s108, 1
      %s110 = scalar_select %p107, %s108, %s109
      %p113 = pneg %p107
      %p114 = scmp.eq.s32.totalorder %s16, 1
      %p115 = por %p113, %p114
      %p116 = scmp.ne.s32.totalorder %s108, %s111
      %p117 = scmp.eq.s32.totalorder %s16, 0
      %p118 = por %p116, %p117
      %p119 = scmp.ne.s32.totalorder %s108, %s111
      %p120 = scmp.eq.s32.totalorder %s21, 1
      %p121 = por %p119, %p120
      %p122 = scmp.ne.s32.totalorder %s111, %s112
      %p123 = scmp.eq.s32.totalorder %s21, 0
      %p124 = por %p122, %p123
      %p125 = scmp.ne.s32.totalorder %s111, %s112
      %p126 = scmp.eq.s32.totalorder %s22, 1
      %p127 = por %p125, %p126
      %p129 = scmp.ne.s32.totalorder %s112, %s128
      %p130 = scmp.eq.s32.totalorder %s22, 0
      %p131 = por %p129, %p130
      %s132 = ssub.s32 %s24, %s31
      %s133 = ssub.s32 %s23, %s35
      %s134 = sor.u32 %s132, %s133
      %p135 = scmp.eq.s32.totalorder %s134, 0
      %s137 = sadd.s32 %s136, 1
      %s138 = scalar_select %p135, %s136, %s137
      %p141 = pneg %p135
      %p142 = scmp.eq.s32.totalorder %s16, 1
      %p143 = por %p141, %p142
      %p144 = scmp.ne.s32.totalorder %s136, %s139
      %p145 = scmp.eq.s32.totalorder %s16, 0
      %p146 = por %p144, %p145
      %p147 = scmp.ne.s32.totalorder %s136, %s139
      %p148 = scmp.eq.s32.totalorder %s21, 1
      %p149 = por %p147, %p148
      %p150 = scmp.ne.s32.totalorder %s139, %s140
      %p151 = scmp.eq.s32.totalorder %s21, 0
      %p152 = por %p150, %p151
      %p153 = scmp.ne.s32.totalorder %s139, %s140
      %p154 = scmp.eq.s32.totalorder %s22, 1
      %p155 = por %p153, %p154
      %p157 = scmp.ne.s32.totalorder %s140, %s156
      %p158 = scmp.eq.s32.totalorder %s22, 0
      %p159 = por %p157, %p158
      %p160 = scmp.le.s32.totalorder 1, %s16
      %p161 = scmp.lt.s32.totalorder %s16, 3
      %p162 = pnand %p160, %p161
      %p163 = pneg %p162
      // Predicated region
      $region9: #{tpu_custom_call.1} parent=5 // pred_check
        _
      $region10: #{tpu_custom_call.1} parent=5 // pred_check_branch
        %165 = sbr.rel (%p162) target = $region12
      $region11: #{tpu_custom_call.1} parent=5 // pred_region
        %s166 = ssub.s32 %s16, 1
        // Predicated region
        $region13: #{tpu_custom_call.1} parent=11 // pred_check
          %p167 = pneg %p49
        $region14: #{tpu_custom_call.1} parent=11 // pred_check_branch
          %169 = sbr.rel (%p167) target = $region16
        $region15: #{tpu_custom_call.1} parent=11 // pred_region
          _
        $region16: #{tpu_custom_call.1} parent=11 // pred_fallthru
          _
        // Predicated region
        $region17: #{tpu_custom_call.1} parent=11 // pred_check
          %p170 = pneg %p70
        $region18: #{tpu_custom_call.1} parent=11 // pred_check_branch
          %172 = sbr.rel (%p170) target = $region20
        $region19: #{tpu_custom_call.1} parent=11 // pred_region
          _
        $region20: #{tpu_custom_call.1} parent=11 // pred_fallthru
          _
        // Predicated region
        $region21: #{tpu_custom_call.1} parent=11 // pred_check
          %p173 = pneg %p124
        $region22: #{tpu_custom_call.1} parent=11 // pred_check_branch
          %175 = sbr.rel (%p173) target = $region24
        $region23: #{tpu_custom_call.1} parent=11 // pred_region
          %177 = vsyncadd [#allocation5], 0
          %s178 = smul.addr %s25, 2
          %s179 = scalar_lea.hbm %s3, %s178
          %s181 = sshll.u32 %s179, 4
          %s182 = int_to_ptr.hbm [resolvable:$true] %s181
          %s183 = sshll.u32 [#allocation4], 4
          %s184 = int_to_ptr.vmem [resolvable:$true] %s183
          %186 = dma.hbm_to_vmem [thread:$0]  %s182, 32, %s184, [#allocation5]
        $region24: #{tpu_custom_call.1} parent=11 // pred_fallthru
          _
      $region12: #{tpu_custom_call.1} parent=5 // pred_fallthru
        _
      %p187 = scmp.lt.s32.totalorder %s16, 2
      // Predicated region
      $region25: #{tpu_custom_call.1} parent=5 // pred_check
        %p188 = pneg %p187
      $region26: #{tpu_custom_call.1} parent=5 // pred_check_branch
        %190 = sbr.rel (%p188) target = $region28
      $region27: #{tpu_custom_call.1} parent=5 // pred_region
        // Predicated region
        $region29: #{tpu_custom_call.1} parent=27 // pred_check
          %p191 = pneg %p92
        $region30: #{tpu_custom_call.1} parent=27 // pred_check_branch
          %193 = sbr.rel (%p191) target = $region32
        $region31: #{tpu_custom_call.1} parent=27 // pred_region
          %p194 = scmp.lt.s32.totalorder %s24, 1
          %s195 = scalar_select %p194, %s24, 1
          %p196 = scmp.lt.s32.totalorder %s23, 0
          %s197 = scalar_select %p196, %s23, 0
          %s198 = sadd.s32 %s197, %s195
          %s199 = smul.addr %s198, 2
          %s200 = scalar_lea.vmem %s2, %s199
        $region32: #{tpu_custom_call.1} parent=27 // pred_fallthru
          _
      $region28: #{tpu_custom_call.1} parent=5 // pred_fallthru
        _
      %p201 = scmp.le.s32.totalorder 1, %s16
      %p202 = scmp.lt.s32.totalorder %s16, 3
      %p203 = pnand %p201, %p202
      %p204 = pneg %p203
      // Predicated region
      $region33: #{tpu_custom_call.1} parent=5 // pred_check
        _
      $region34: #{tpu_custom_call.1} parent=5 // pred_check_branch
        %206 = sbr.rel (%p203) target = $region36
      $region35: #{tpu_custom_call.1} parent=5 // pred_region
        %s207 = ssub.s32 %s16, 1
        // Predicated region
        $region37: #{tpu_custom_call.1} parent=35 // pred_check
          %p208 = pneg %p124
        $region38: #{tpu_custom_call.1} parent=35 // pred_check_branch
          %210 = sbr.rel (%p208) target = $region40
        $region39: #{tpu_custom_call.1} parent=35 // pred_region
          %212 = dma.done [#allocation5], 32
        $region40: #{tpu_custom_call.1} parent=35 // pred_fallthru
          _
        %p213 = pneg %p49
        %p214 = pneg %p46
        %p215 = pneg %p70
        %p216 = pneg %p67
        %p217 = scmp.lt.s32.totalorder %s26, 1
        %s218 = scalar_select %p217, %s26, 1
        %p219 = scmp.lt.s32.totalorder %s25, 0
        %s220 = scalar_select %p219, %s25, 0
        %s221 = sadd.s32 %s220, %s218
        %s222 = smul.addr %s221, 2
        %s223 = scalar_lea.vmem %s2, %s222
        %p224 = pneg %p98
        %p225 = pneg %p95
        %p226 = pneg %p124
        %p227 = pneg %p121
        %p228 = pneg %p152
        %p229 = pneg %p149
        %s230 = sand.u32 %s139, 1
        %s231 = scalar_lea.sflag [#allocation6], %s230
        %s232 = sand.u32 %s139, 1
        %s233 = smul.addr %s232, 2
        %s234 = scalar_lea.vmem [#allocation7], %s233
        %p235 = scmp.lt.s32.totalorder %s26, 1
        %s236 = scalar_select %p235, %s26, 1
        %p237 = scmp.lt.s32.totalorder %s25, 0
        %s238 = scalar_select %p237, %s25, 0
        %s239 = sadd.s32 %s238, %s236
        %s240 = smul.addr %s239, 2
        %s241 = scalar_lea.vmem %s2, %s240
        %s242 = sld [smem:[#allocation2]]
        %v243 = vld [vmem:[%s241] sm:$0x3]
        %v244 = vld [vmem:[#allocation4] sm:$0x3]
        %v245 = vstv %s242
        %v246 = vmul.f32 %v245, %v244
        %v247 = vadd.f32 %v243, %v246
        %248 = vst [vmem:[%s234] sm:$0x3] %v247
        %s249 = sand.u32 %s139, 1
        %s250 = scalar_lea.sflag [#allocation6], %s249
        %s251 = sand.u32 %s139, 1
        %s252 = smul.addr %s251, 2
        %s253 = scalar_lea.vmem [#allocation7], %s252
        // Predicated region
        $region41: #{tpu_custom_call.1} parent=35 // pred_check
          %p254 = pneg %p149
        $region42: #{tpu_custom_call.1} parent=35 // pred_check_branch
          %256 = sbr.rel (%p254) target = $region44
        $region43: #{tpu_custom_call.1} parent=35 // pred_region
          %258 = vsyncadd %s250, 0
          %s259 = sadd.s32 %s25, %s26
          %s260 = smul.addr %s259, 2
          %s261 = scalar_lea.hbm %s4, %s260
          %s263 = sshll.u32 %s253, 4
          %s264 = int_to_ptr.vmem [resolvable:$true] %s263
          %s265 = sshll.u32 %s261, 4
          %s266 = int_to_ptr.hbm [resolvable:$true] %s265
          %268 = dma.vmem_to_hbm [thread:$0]  %s264, 32, %s266, %s250
        $region44: #{tpu_custom_call.1} parent=35 // pred_fallthru
          _
      $region36: #{tpu_custom_call.1} parent=5 // pred_fallthru
        _
      %p269 = scmp.le.s32.totalorder 2, %s16
      // Predicated region
      $region45: #{tpu_custom_call.1} parent=5 // pred_check
        %p270 = pneg %p269
      $region46: #{tpu_custom_call.1} parent=5 // pred_check_branch
        %272 = sbr.rel (%p270) target = $region48
      $region47: #{tpu_custom_call.1} parent=5 // pred_region
        %s273 = ssub.s32 %s16, 2
        // Predicated region
        $region49: #{tpu_custom_call.1} parent=47 // pred_check
          %p274 = pneg %p155
        $region50: #{tpu_custom_call.1} parent=47 // pred_check_branch
          %276 = sbr.rel (%p274) target = $region52
        $region51: #{tpu_custom_call.1} parent=47 // pred_region
          %s277 = sand.u32 %s140, 1
          %s278 = scalar_lea.sflag [#allocation6], %s277
          %s279 = sand.u32 %s140, 1
          %s280 = smul.addr %s279, 2
          %s281 = scalar_lea.vmem [#allocation7], %s280
          %283 = dma.done %s278, 32
        $region52: #{tpu_custom_call.1} parent=47 // pred_fallthru
          _
      $region48: #{tpu_custom_call.1} parent=5 // pred_fallthru
        _
    $region6: #{tpu_custom_call.1} parent=1 // loop_footer
      %s20 = sadd.s32 1, %s16
    $region7: #{tpu_custom_call.1} parent=1 // loop_footer_branch
      %15 = sbr.rel target = $region3
    $region8: #{tpu_custom_call.1} parent=1 // loop_exit
      _
    %284 = vsyncpa [#allocation5], 1
    %s285 = scalar_lea.sflag [#allocation5], 1
    %286 = vsyncpa %s285, 1
    %287 = vsyncpa [#allocation6], 1
    %s288 = scalar_lea.sflag [#allocation6], 1
    %289 = vsyncpa %s288, 1

</llo_original>
